<compile_context>
chip_gen: v7x
topology: tpu7x:2x2x1
jax: 0.10.0
libtpu: 0.0.40
codegen_flags: <defaults>
</compile_context>

<pallas_src>
import jax
import jax.numpy as jnp
from jax.experimental import pallas as pl
from jax.experimental.pallas import tpu as pltpu

H1 = 128       # hidden size of layer 1
H2 = 256       # hidden size of layer 2
OUT_PAD = 128  # lane-dense padded width of the final layer


def actor_mlp_kernel(x_ref, w1_ref, w2_ref, w3_ref, b_ref, o_ref):
    """One batch tile: relu(relu(x@W1+b1)@W2+b2)@W3+b3 (bf16 MXU, f32 accum)."""
    b = b_ref[...]                                    # (3, H2) f32: rows b1|b2|b3 (padded)

    # Layer 1: Linear(input_size -> 128) + ReLU
    x = x_ref[...].astype(jnp.bfloat16)
    h1 = jnp.dot(x, w1_ref[...], preferred_element_type=jnp.float32)
    h1 = jnp.maximum(h1 + b[0:1, :H1], 0.0)           # f32 VPU work

    # Layer 2: Linear(128 -> 256) + ReLU
    h2 = jnp.dot(h1.astype(jnp.bfloat16), w2_ref[...],
                 preferred_element_type=jnp.float32)
    h2 = jnp.maximum(h2 + b[1:2, :H2], 0.0)

    # Layer 3: Linear(256 -> OUT_PAD) (zero-padded columns beyond out_size)
    out = jnp.dot(h2.astype(jnp.bfloat16), w3_ref[...],
                  preferred_element_type=jnp.float32)
    o_ref[...] = (out + b[2:3, :OUT_PAD]).astype(o_ref.dtype)


def actor_forward(state, params, *, tm=512):
    """state: (B, input_size) f32. Returns (B, output_size) f32."""
    w1, w2, w3 = params["w1"], params["w2"], params["w3"]
    b_packed = params["b_packed"]
    out_size = params["out_size"]

    B, in_size = state.shape
    TM = min(tm, B)                       # batch tile (B=8 here -> one grid step)
    grid = (pl.cdiv(B, TM),)

    flops = 2 * B * (in_size * H1 + H1 * H2 + H2 * OUT_PAD)
    bytes_accessed = (
        state.size * state.dtype.itemsize
        + (w1.size + w2.size + w3.size) * 2          # bf16 weights
        + b_packed.size * 4                          # f32 biases
        + B * OUT_PAD * 4)                           # f32 output

    # Weights/biases: full-array blocks, same block every grid step -> resident.
    resident = lambda arr: pl.BlockSpec(arr.shape, lambda i: (0, 0))

    out_padded = pl.pallas_call(
        actor_mlp_kernel,
        out_shape=jax.ShapeDtypeStruct((B, OUT_PAD), jnp.float32),
        grid=grid,
        in_specs=[
            pl.BlockSpec((TM, in_size), lambda i: (i, 0)),   # activations: pipelined
            resident(w1), resident(w2), resident(w3),
            resident(b_packed),
        ],
        out_specs=pl.BlockSpec((TM, OUT_PAD), lambda i: (i, 0)),
        compiler_params=pltpu.CompilerParams(
            dimension_semantics=("parallel",)),              # megacore on v7x
        cost_estimate=pl.CostEstimate(
            flops=flops, transcendentals=0, bytes_accessed=bytes_accessed),
    )(state, w1, w2, w3, b_packed)

    return out_padded[:, :out_size]


def init_actor_params(key, input_size, output_size):
    """PyTorch-Linear-style init (uniform +-1/sqrt(fan_in)).
    Weights stored as (in_features, out_features); w3/b3 zero-padded to OUT_PAD;
    weights downcast to bf16 for the MXU; biases packed into one (3, H2) f32 array."""
    assert output_size <= OUT_PAD
    dims = [(input_size, H1), (H1, H2), (H2, output_size)]
    w_f32, b_f32 = [], []
    for fan_in, fan_out in dims:
        key, kw, kb = jax.random.split(key, 3)
        bound = 1.0 / float(fan_in) ** 0.5
        w_f32.append(jax.random.uniform(kw, (fan_in, fan_out), jnp.float32,
                                        -bound, bound))
        b_f32.append(jax.random.uniform(kb, (fan_out,), jnp.float32,
                                        -bound, bound))

    # Lane-dense padding for the last layer.
    w3_pad = jnp.zeros((H2, OUT_PAD), jnp.float32).at[:, :output_size].set(w_f32[2])
    b3_pad = jnp.zeros((OUT_PAD,), jnp.float32).at[:output_size].set(b_f32[2])

    # Pack all biases into a single f32 array (fewer input refs / DMAs).
    b_packed = jnp.zeros((3, H2), jnp.float32)
    b_packed = b_packed.at[0, :H1].set(b_f32[0])
    b_packed = b_packed.at[1, :H2].set(b_f32[1])
    b_packed = b_packed.at[2, :OUT_PAD].set(b3_pad)

    return {
        "w1": w_f32[0].astype(jnp.bfloat16),
        "w2": w_f32[1].astype(jnp.bfloat16),
        "w3": w3_pad.astype(jnp.bfloat16),
        "b_packed": b_packed,
        "out_size": output_size,
        # f32 originals kept only for the reference check below.
        "w1_f32": w_f32[0], "w2_f32": w_f32[1], "w3_f32": w_f32[2],
        "b1_f32": b_f32[0], "b2_f32": b_f32[1], "b3_f32": b_f32[2],
    }


def actor_reference(state, params):
    """Pure-JAX reference mirroring the kernel's bf16-operand / f32-accum math."""
    def mm(a, w):
        return jnp.dot(a.astype(jnp.bfloat16), w.astype(jnp.bfloat16),
                       preferred_element_type=jnp.float32)
    h = jnp.maximum(mm(state, params["w1_f32"]) + params["b1_f32"], 0.0)
    h = jnp.maximum(mm(h, params["w2_f32"]) + params["b2_f32"], 0.0)
    return mm(h, params["w3_f32"]) + params["b3_f32"]


if __name__ == "__main__":
    key = jax.random.PRNGKey(0)
    batch, input_size, output_size = 8, 32, 8

    key, kx = jax.random.split(key)
    state = jax.random.normal(kx, (batch, input_size), jnp.float32)
    params = init_actor_params(key, input_size, output_size)

    out = jax.block_until_ready(actor_forward(state, params))
    ref = actor_reference(state, params)

    assert out.shape == (batch, output_size)
    assert jnp.allclose(out, ref, atol=2e-3, rtol=2e-3), "mismatch vs reference"

    print("KERNEL_OK")
</pallas_src>

<mosaic_0001>
module attributes {stable_mosaic.version = 11 : i64} {
  func.func @actor_mlp_kernel(%arg0: i32, %arg1: memref<8x32xf32, #tpu.memory_space<vmem>>, %arg2: memref<32x128xbf16, #tpu.memory_space<vmem>>, %arg3: memref<128x256xbf16, #tpu.memory_space<vmem>>, %arg4: memref<256x128xbf16, #tpu.memory_space<vmem>>, %arg5: memref<3x256xf32, #tpu.memory_space<vmem>>, %arg6: memref<8x128xf32, #tpu.memory_space<vmem>>) attributes {dimension_semantics = [#tpu.dimension_semantics<parallel>], iteration_bounds = array<i64: 1>, scalar_prefetch = 0 : i64, scratch_operands = 0 : i64, tpu.core_type = #tpu.core_type<tc>, window_params = [{transform_indices = @transform_0, window_bounds = array<i64: 8, 32>}, {pipeline_mode = #tpu.pipeline_mode<synchronous>, transform_indices = @transform_1, window_bounds = array<i64: 32, 128>}, {pipeline_mode = #tpu.pipeline_mode<synchronous>, transform_indices = @transform_2, window_bounds = array<i64: 128, 256>}, {pipeline_mode = #tpu.pipeline_mode<synchronous>, transform_indices = @transform_3, window_bounds = array<i64: 256, 128>}, {pipeline_mode = #tpu.pipeline_mode<synchronous>, transform_indices = @transform_4, window_bounds = array<i64: 3, 256>}, {transform_indices = @transform_5, window_bounds = array<i64: 8, 128>}]} {
    %c0 = arith.constant 0 : index
    %c0_0 = arith.constant 0 : index
    %0 = vector.load %arg5[%c0, %c0_0] : memref<3x256xf32, #tpu.memory_space<vmem>>, vector<3x256xf32>
    %c0_1 = arith.constant 0 : index
    %c0_2 = arith.constant 0 : index
    %1 = vector.load %arg1[%c0_1, %c0_2] : memref<8x32xf32, #tpu.memory_space<vmem>>, vector<8x32xf32>
    %2 = arith.truncf %1 : vector<8x32xf32> to vector<8x32xbf16>
    %c0_3 = arith.constant 0 : index
    %c0_4 = arith.constant 0 : index
    %3 = vector.load %arg2[%c0_3, %c0_4] : memref<32x128xbf16, #tpu.memory_space<vmem>>, vector<32x128xbf16>
    %cst = arith.constant dense<0.000000e+00> : vector<8x128xf32>
    %4 = tpu.matmul %2, %3, %cst {dimension_numbers = #tpu.dot_dimension_numbers<[1], [0], [0], [1], [0, 0, 1, 1], [], []>} : vector<8x32xbf16>, vector<32x128xbf16>, vector<8x128xf32> -> vector<8x128xf32>
    %5 = vector.extract_strided_slice %0 {offsets = [0, 0], sizes = [1, 128], strides = [1, 1]} : vector<3x256xf32> to vector<1x128xf32>
    %6 = vector.broadcast %5 : vector<1x128xf32> to vector<8x128xf32>
    %7 = arith.addf %4, %6 : vector<8x128xf32>
    %cst_5 = arith.constant 0.000000e+00 : f32
    %8 = vector.broadcast %cst_5 : f32 to vector<8x128xf32>
    %9 = arith.maximumf %7, %8 : vector<8x128xf32>
    %10 = arith.truncf %9 : vector<8x128xf32> to vector<8x128xbf16>
    %c0_6 = arith.constant 0 : index
    %c0_7 = arith.constant 0 : index
    %11 = vector.load %arg3[%c0_6, %c0_7] : memref<128x256xbf16, #tpu.memory_space<vmem>>, vector<128x256xbf16>
    %cst_8 = arith.constant dense<0.000000e+00> : vector<8x256xf32>
    %12 = tpu.matmul %10, %11, %cst_8 {dimension_numbers = #tpu.dot_dimension_numbers<[1], [0], [0], [1], [0, 0, 1, 1], [], []>} : vector<8x128xbf16>, vector<128x256xbf16>, vector<8x256xf32> -> vector<8x256xf32>
    %13 = vector.extract_strided_slice %0 {offsets = [1, 0], sizes = [1, 256], strides = [1, 1]} : vector<3x256xf32> to vector<1x256xf32>
    %14 = vector.broadcast %13 : vector<1x256xf32> to vector<8x256xf32>
    %15 = arith.addf %12, %14 : vector<8x256xf32>
    %cst_9 = arith.constant 0.000000e+00 : f32
    %16 = vector.broadcast %cst_9 : f32 to vector<8x256xf32>
    %17 = arith.maximumf %15, %16 : vector<8x256xf32>
    %18 = arith.truncf %17 : vector<8x256xf32> to vector<8x256xbf16>
    %c0_10 = arith.constant 0 : index
    %c0_11 = arith.constant 0 : index
    %19 = vector.load %arg4[%c0_10, %c0_11] : memref<256x128xbf16, #tpu.memory_space<vmem>>, vector<256x128xbf16>
    %cst_12 = arith.constant dense<0.000000e+00> : vector<8x128xf32>
    %20 = tpu.matmul %18, %19, %cst_12 {dimension_numbers = #tpu.dot_dimension_numbers<[1], [0], [0], [1], [0, 0, 1, 1], [], []>} : vector<8x256xbf16>, vector<256x128xbf16>, vector<8x128xf32> -> vector<8x128xf32>
    %21 = vector.extract_strided_slice %0 {offsets = [2, 0], sizes = [1, 128], strides = [1, 1]} : vector<3x256xf32> to vector<1x128xf32>
    %22 = vector.broadcast %21 : vector<1x128xf32> to vector<8x128xf32>
    %23 = arith.addf %20, %22 : vector<8x128xf32>
    %c0_13 = arith.constant 0 : index
    %c0_14 = arith.constant 0 : index
    %24 = vector.load %arg6[%c0_13, %c0_14] : memref<8x128xf32, #tpu.memory_space<vmem>>, vector<8x128xf32>
    tpu.vector_store %arg6[%c0_13, %c0_14], %23 {strides = array<i32>} : memref<8x128xf32, #tpu.memory_space<vmem>>, vector<8x128xf32>,
    return
  }
  func.func @transform_0(%arg0: i32) -> (i32, i32) {
    %c0_i32 = arith.constant 0 : i32
    %c0_i32_0 = arith.constant 0 : i32
    return %arg0, %c0_i32 : i32, i32
  }
  func.func @transform_1(%arg0: i32) -> (i32, i32) {
    %c0_i32 = arith.constant 0 : i32
    %c0_i32_0 = arith.constant 0 : i32
    %c0_i32_1 = arith.constant 0 : i32
    return %c0_i32, %c0_i32_0 : i32, i32
  }
  func.func @transform_2(%arg0: i32) -> (i32, i32) {
    %c0_i32 = arith.constant 0 : i32
    %c0_i32_0 = arith.constant 0 : i32
    %c0_i32_1 = arith.constant 0 : i32
    return %c0_i32, %c0_i32_0 : i32, i32
  }
  func.func @transform_3(%arg0: i32) -> (i32, i32) {
    %c0_i32 = arith.constant 0 : i32
    %c0_i32_0 = arith.constant 0 : i32
    %c0_i32_1 = arith.constant 0 : i32
    return %c0_i32, %c0_i32_0 : i32, i32
  }
  func.func @transform_4(%arg0: i32) -> (i32, i32) {
    %c0_i32 = arith.constant 0 : i32
    %c0_i32_0 = arith.constant 0 : i32
    %c0_i32_1 = arith.constant 0 : i32
    return %c0_i32, %c0_i32_0 : i32, i32
  }
  func.func @transform_5(%arg0: i32) -> (i32, i32) {
    %c0_i32 = arith.constant 0 : i32
    %c0_i32_0 = arith.constant 0 : i32
    return %arg0, %c0_i32 : i32, i32
  }
}

</mosaic_0001>

<llo_original>
// kernel: tpu_custom_call.1
$region0: #{tpu_custom_call.1}
  #allocation0 [shape = 'u32[]', space=smem, size = 0x4, offset = 0x4, fixed_abs, tag = 'smem constant byte address 0x4 - core index']
  #allocation1 [shape = 'u32[144,128]{1,0:T(1,128)}', space=vmem, size = 0x12000, scoped, tag = 'internal scratch']
  %s0 = inlined_call_operand.hbm [shape: f32[8,32], index: 0, kind: input, shape index: {}]
  %s1 = inlined_call_operand.hbm [shape: bf16[32,128], index: 1, kind: input, shape index: {}]
  %s2 = inlined_call_operand.hbm [shape: bf16[128,256], index: 2, kind: input, shape index: {}]
  %s3 = inlined_call_operand.hbm [shape: bf16[256,128], index: 3, kind: input, shape index: {}]
  %s4 = inlined_call_operand.vmem [shape: f32[3,256], index: 4, kind: input, shape index: {}]
  %s5 = inlined_call_operand.hbm [shape: f32[8,128], index: 5, kind: output, shape index: {}]
  %s6 = sld [smem:[#allocation0]]
  $region46: #{tpu_custom_call.1} parent=0
    _
  %s8 = ssub.s32 1, %s6
  %s9 = scalar_select 0, %s8, %s6
  $region1: #{tpu_custom_call.1} parent=0
    #allocation2 [shape = 'u8[4096]{0}', space=vmem, size = 0x1000, scoped, tag = 'input window, operand 0, single buffered']
    #allocation3 [shape = 's32[1]{0}', space=sflag, size = 0x4, scoped, tag = 'scoped memory for tpu_custom_call.1']
    #allocation4 [shape = 's32[1]{0}', space=sflag, size = 0x4, scoped, tag = 'scoped memory for tpu_custom_call.1']
    #allocation5 [shape = 'u8[8192]{0}', space=vmem, size = 0x2000, scoped, tag = 'input window, operand 1, single buffered']
    #allocation6 [shape = 's32[1]{0}', space=sflag, size = 0x4, scoped, tag = 'scoped memory for tpu_custom_call.1']
    #allocation7 [shape = 'u8[65536]{0}', space=vmem, size = 0x10000, scoped, tag = 'input window, operand 2, single buffered']
    #allocation8 [shape = 'u8[65536]{0}', space=vmem, size = 0x10000, scoped, tag = 'input window, operand 3, single buffered']
    #allocation9 [shape = 's32[1]{0}', space=sflag, size = 0x4, scoped, tag = 'scoped memory for tpu_custom_call.1']
    #allocation10 [shape = 'u8[4096]{0}', space=vmem, size = 0x1000, scoped, tag = 'output window, operand 0, single buffered']
    %10 = vsyncpa [#allocation3], 0
    %11 = vsyncpa [#allocation6], 0
    %12 = vsyncpa [#allocation9], 0
    %13 = vsyncpa [#allocation4], 0
    // Predicated region
    $region2: #{tpu_custom_call.1} parent=1 // pred_check
      _
    $region3: #{tpu_custom_call.1} parent=1 // pred_check_branch
      %15 = sbr.rel (0) target = $region5
    $region4: #{tpu_custom_call.1} parent=1 // pred_region
      %s17 = ssub.s32 128, 128
      %18 = vsyncadd [#allocation3], %s17
      %s20 = sshll.u32 [#allocation2], 4
      %s21 = int_to_ptr.vmem [resolvable:$true] %s20
      %23 = dma.hbm_to_vmem [thread:$0]  %s0, 128, %s21, [#allocation3]
    $region5: #{tpu_custom_call.1} parent=1 // pred_fallthru
      _
    // Predicated region
    $region6: #{tpu_custom_call.1} parent=1 // pred_check
      _
    $region7: #{tpu_custom_call.1} parent=1 // pred_check_branch
      %25 = sbr.rel (0) target = $region9
    $region8: #{tpu_custom_call.1} parent=1 // pred_region
      %s27 = ssub.s32 256, 256
      %28 = vsyncadd [#allocation6], %s27
      %s29 = sshll.u32 [#allocation5], 4
      %s30 = int_to_ptr.vmem [resolvable:$true] %s29
      %35 = dma.hbm_to_vmem [thread:$0]  %s1, 256, %s30, [#allocation6], 64, 64, 4
    $region9: #{tpu_custom_call.1} parent=1 // pred_fallthru
      _
    // Predicated region
    $region10: #{tpu_custom_call.1} parent=1 // pred_check
      _
    $region11: #{tpu_custom_call.1} parent=1 // pred_check_branch
      %37 = sbr.rel (0) target = $region13
    $region12: #{tpu_custom_call.1} parent=1 // pred_region
      %s39 = ssub.s32 2048, 2048
      %40 = vsyncadd [#allocation6], %s39
      %s41 = sshll.u32 [#allocation7], 4
      %s42 = int_to_ptr.vmem [resolvable:$true] %s41
      %47 = dma.hbm_to_vmem [thread:$0]  %s2, 2048, %s42, [#allocation6], 128, 128, 8
    $region13: #{tpu_custom_call.1} parent=1 // pred_fallthru
      _
    // Predicated region
    $region14: #{tpu_custom_call.1} parent=1 // pred_check
      _
    $region15: #{tpu_custom_call.1} parent=1 // pred_check_branch
      %49 = sbr.rel (0) target = $region17
    $region16: #{tpu_custom_call.1} parent=1 // pred_region
      %s51 = ssub.s32 2048, 2048
      %52 = vsyncadd [#allocation9], %s51
      %s53 = sshll.u32 [#allocation8], 4
      %s54 = int_to_ptr.vmem [resolvable:$true] %s53
      %59 = dma.hbm_to_vmem [thread:$0]  %s3, 2048, %s54, [#allocation9], 64, 64, 4
    $region17: #{tpu_custom_call.1} parent=1 // pred_fallthru
      _
    // Predicated region
    $region18: #{tpu_custom_call.1} parent=1 // pred_check
      _
    $region19: #{tpu_custom_call.1} parent=1 // pred_check_branch
      %61 = sbr.rel (0) target = $region21
    $region20: #{tpu_custom_call.1} parent=1 // pred_region
      _
    $region21: #{tpu_custom_call.1} parent=1 // pred_fallthru
      _
    // Predicated region
    $region22: #{tpu_custom_call.1} parent=1 // pred_check
      _
    $region23: #{tpu_custom_call.1} parent=1 // pred_check_branch
      %63 = sbr.rel (0) target = $region25
    $region24: #{tpu_custom_call.1} parent=1 // pred_region
      %64 = dma.done [#allocation3], 128
    $region25: #{tpu_custom_call.1} parent=1 // pred_fallthru
      _
    // Predicated region
    $region26: #{tpu_custom_call.1} parent=1 // pred_check
      _
    $region27: #{tpu_custom_call.1} parent=1 // pred_check_branch
      %66 = sbr.rel (0) target = $region29
    $region28: #{tpu_custom_call.1} parent=1 // pred_region
      %67 = dma.done [#allocation6], 256
    $region29: #{tpu_custom_call.1} parent=1 // pred_fallthru
      _
    // Predicated region
    $region30: #{tpu_custom_call.1} parent=1 // pred_check
      _
    $region31: #{tpu_custom_call.1} parent=1 // pred_check_branch
      %69 = sbr.rel (0) target = $region33
    $region32: #{tpu_custom_call.1} parent=1 // pred_region
      %70 = dma.done [#allocation6], 2048
    $region33: #{tpu_custom_call.1} parent=1 // pred_fallthru
      _
    // Predicated region
    $region34: #{tpu_custom_call.1} parent=1 // pred_check
      _
    $region35: #{tpu_custom_call.1} parent=1 // pred_check_branch
      %72 = sbr.rel (0) target = $region37
    $region36: #{tpu_custom_call.1} parent=1 // pred_region
      %73 = dma.done [#allocation9], 2048
    $region37: #{tpu_custom_call.1} parent=1 // pred_fallthru
      _
    %v75 = vld [vmem:[%s4] sm:$0x77]
    %v76 = vld [vmem:[#allocation2] sm:$0xff]
    %v77 = vpack.c.bf16 %v76, %v76
    %v78 = vld [vmem:[#allocation5] sm:$0xf]
    %v79 = vld [vmem:[#allocation5 + $0x4] sm:$0xf]
    %v80 = vld [vmem:[#allocation5 + $0x8] sm:$0xf]
    %v81 = vld [vmem:[#allocation5 + $0xc] sm:$0xf]
    %v82 = vlaneseq
    %v83 = vshrl.u32 %v82, 7
    %v84 = vsub.s32 0, %v83
    %v85 = vrot.slane %v75, %v84
    %v90 = vunpack.c.l.b16 %v78
    %v91 = vunpack.c.l.b16 %v79
    %v92 = vunpack.c.l.b16 %v80
    %v93 = vunpack.c.l.b16 %v81
    %v94 = vpack.c.b16 %v91, %v90
    %v95 = vpack.c.b16 %v93, %v92
    %vm98 = vcmask 261120
    %v100 = vsel %vm98, %v77, 0
    %102 = vmatprep.subr.bf16.mxu0 0
    %103 = vmatpush1.bf16.msra.mxu0 %v94
    %104 = vmatprep.subr.bf16.mxu0 0
    %105 = vmatpush1.bf16.msra.mxu0 %v95
    %106 = vmatprep.subr.bf16.mxu0 0
    %107 = vmatpush1.bf16.msra.mxu0 0
    %108 = vmatprep.subr.bf16.mxu0 0
    %109 = vmatpush1.bf16.msra.mxu0 0
    %110 = vmatprep.subr.bf16.mxu0 0
    %111 = vmatpush1.bf16.msra.mxu0 0
    %112 = vmatprep.subr.bf16.mxu0 0
    %113 = vmatpush1.bf16.msra.mxu0 0
    %114 = vmatprep.subr.bf16.mxu0 0
    %115 = vmatpush1.bf16.msra.mxu0 0
    %116 = vmatprep.subr.bf16.mxu0 0
    %117 = vmatpush1.bf16.msra.mxu0 0
    %118 = vmatprep.subr.bf16.mxu0 0
    %119 = vmatpush1.bf16.msra.mxu0 0
    %120 = vmatprep.subr.bf16.mxu0 0
    %121 = vmatpush1.bf16.msra.mxu0 0
    %122 = vmatprep.subr.bf16.mxu0 0
    %123 = vmatpush1.bf16.msra.mxu0 0
    %124 = vmatprep.subr.bf16.mxu0 0
    %125 = vmatpush1.bf16.msra.mxu0 0
    %126 = vmatprep.subr.bf16.mxu0 0
    %127 = vmatpush1.bf16.msra.mxu0 0
    %128 = vmatprep.subr.bf16.mxu0 0
    %129 = vmatpush1.bf16.msra.mxu0 0
    %130 = vmatprep.subr.bf16.mxu0 0
    %131 = vmatpush1.bf16.msra.mxu0 0
    %132 = vmatprep.subr.bf16.mxu0 0
    %133 = vmatpush1.bf16.msra.mxu0 0
    %134 = vmatprep.mubr.bf16.mxu0 0
    %135 = vmatmul.mubr.bf16.gmra.mrb[0].mxu0 %v100
    %v136 = vpop.f32.mrb[0].mxu0
    %v137 = vadd.f32 %v85, %v136
    %v138 = vpop.f32.mrb[0].mxu0
    %v139 = vpop.f32.mrb[0].mxu0
    %v140 = vpop.f32.mrb[0].mxu0
    %141 = vdwg.mxu0
    %v142 = vmax.f32 %v137, 0.0
    %v143 = vpack.c.bf16 %v142, %v142
    %v144 = vld [vmem:[#allocation7] sm:$0xff]
    %v145 = vld [vmem:[#allocation7 + $0x8] sm:$0xff]
    %v146 = vld [vmem:[#allocation7 + $0x10] sm:$0xff]
    %v147 = vld [vmem:[#allocation7 + $0x18] sm:$0xff]
    %v148 = vld [vmem:[#allocation7 + $0x20] sm:$0xff]
    %v149 = vld [vmem:[#allocation7 + $0x28] sm:$0xff]
    %v150 = vld [vmem:[#allocation7 + $0x30] sm:$0xff]
    %v151 = vld [vmem:[#allocation7 + $0x38] sm:$0xff]
    %v152 = vld [vmem:[#allocation7 + $0x40] sm:$0xff]
    %v153 = vld [vmem:[#allocation7 + $0x48] sm:$0xff]
    %v154 = vld [vmem:[#allocation7 + $0x50] sm:$0xff]
    %v155 = vld [vmem:[#allocation7 + $0x58] sm:$0xff]
    %v156 = vld [vmem:[#allocation7 + $0x60] sm:$0xff]
    %v157 = vld [vmem:[#allocation7 + $0x68] sm:$0xff]
    %v158 = vld [vmem:[#allocation7 + $0x70] sm:$0xff]
    %v159 = vld [vmem:[#allocation7 + $0x78] sm:$0xff]
    %v161 = vlaneseq
    %v162 = vshrl.u32 %v161, 7
    %v163 = vsub.s32 1, %v162
    %v164 = vrot.slane %v75, %v163
    %v165 = vlaneseq
    %v166 = vshrl.u32 %v165, 7
    %v167 = vsub.s32 5, %v166
    %v168 = vrot.slane %v75, %v167
    %v171 = vlaneseq
    %v172 = vshrl.u32 %v171, 7
    %v173 = vsub.s32 1, %v172
    %v174 = vrot.slane %v164, %v173
    %v175 = vlaneseq
    %v176 = vshrl.u32 %v175, 7
    %v177 = vsub.s32 1, %v176
    %v178 = vrot.slane %v168, %v177
    %v195 = vunpack.c.l.b16 %v144
    %v196 = vunpack.c.h.b16 %v144
    %v197 = vunpack.c.l.b16 %v145
    %v198 = vunpack.c.h.b16 %v145
    %v199 = vunpack.c.l.b16 %v146
    %v200 = vunpack.c.h.b16 %v146
    %v201 = vunpack.c.l.b16 %v147
    %v202 = vunpack.c.h.b16 %v147
    %v203 = vunpack.c.l.b16 %v148
    %v204 = vunpack.c.h.b16 %v148
    %v205 = vunpack.c.l.b16 %v149
    %v206 = vunpack.c.h.b16 %v149
    %v207 = vunpack.c.l.b16 %v150
    %v208 = vunpack.c.h.b16 %v150
    %v209 = vunpack.c.l.b16 %v151
    %v210 = vunpack.c.h.b16 %v151
    %v211 = vunpack.c.l.b16 %v152
    %v212 = vunpack.c.h.b16 %v152
    %v213 = vunpack.c.l.b16 %v153
    %v214 = vunpack.c.h.b16 %v153
    %v215 = vunpack.c.l.b16 %v154
    %v216 = vunpack.c.h.b16 %v154
    %v217 = vunpack.c.l.b16 %v155
    %v218 = vunpack.c.h.b16 %v155
    %v219 = vunpack.c.l.b16 %v156
    %v220 = vunpack.c.h.b16 %v156
    %v221 = vunpack.c.l.b16 %v157
    %v222 = vunpack.c.h.b16 %v157
    %v223 = vunpack.c.l.b16 %v158
    %v224 = vunpack.c.h.b16 %v158
    %v225 = vunpack.c.l.b16 %v159
    %v226 = vunpack.c.h.b16 %v159
    %v227 = vpack.c.b16 %v197, %v195
    %v228 = vpack.c.b16 %v198, %v196
    %v229 = vpack.c.b16 %v201, %v199
    %v230 = vpack.c.b16 %v202, %v200
    %v231 = vpack.c.b16 %v205, %v203
    %v232 = vpack.c.b16 %v206, %v204
    %v233 = vpack.c.b16 %v209, %v207
    %v234 = vpack.c.b16 %v210, %v208
    %v235 = vpack.c.b16 %v213, %v211
    %v236 = vpack.c.b16 %v214, %v212
    %v237 = vpack.c.b16 %v217, %v215
    %v238 = vpack.c.b16 %v218, %v216
    %v239 = vpack.c.b16 %v221, %v219
    %v240 = vpack.c.b16 %v222, %v220
    %v241 = vpack.c.b16 %v225, %v223
    %v242 = vpack.c.b16 %v226, %v224
    %259 = vmatprep.subr.bf16.mxu0 %v228
    %260 = vmatpush1.bf16.msra.mxu0 %v227
    %261 = vmatprep.subr.bf16.mxu0 %v230
    %262 = vmatpush1.bf16.msra.mxu0 %v229
    %263 = vmatprep.subr.bf16.mxu0 %v232
    %264 = vmatpush1.bf16.msra.mxu0 %v231
    %265 = vmatprep.subr.bf16.mxu0 %v234
    %266 = vmatpush1.bf16.msra.mxu0 %v233
    %267 = vmatprep.subr.bf16.mxu0 %v236
    %268 = vmatpush1.bf16.msra.mxu0 %v235
    %269 = vmatprep.subr.bf16.mxu0 %v238
    %270 = vmatpush1.bf16.msra.mxu0 %v237
    %271 = vmatprep.subr.bf16.mxu0 %v240
    %272 = vmatpush1.bf16.msra.mxu0 %v239
    %273 = vmatprep.subr.bf16.mxu0 %v242
    %274 = vmatpush1.bf16.msra.mxu0 %v241
    %275 = vmatprep.subr.bf16.mxu0 0
    %276 = vmatpush1.bf16.msra.mxu0 0
    %277 = vmatprep.subr.bf16.mxu0 0
    %278 = vmatpush1.bf16.msra.mxu0 0
    %279 = vmatprep.subr.bf16.mxu0 0
    %280 = vmatpush1.bf16.msra.mxu0 0
    %281 = vmatprep.subr.bf16.mxu0 0
    %282 = vmatpush1.bf16.msra.mxu0 0
    %283 = vmatprep.subr.bf16.mxu0 0
    %284 = vmatpush1.bf16.msra.mxu0 0
    %285 = vmatprep.subr.bf16.mxu0 0
    %286 = vmatpush1.bf16.msra.mxu0 0
    %287 = vmatprep.subr.bf16.mxu0 0
    %288 = vmatpush1.bf16.msra.mxu0 0
    %289 = vmatprep.subr.bf16.mxu0 0
    %290 = vmatpush1.bf16.msra.mxu0 0
    %291 = vmatprep.mubr.bf16.mxu0 0
    %292 = vmatmul.mubr.bf16.gmra.mrb[0].mxu0 %v143
    %v293 = vpop.f32.mrb[0].mxu0
    %v294 = vadd.f32 %v174, %v293
    %v295 = vpop.f32.mrb[0].mxu0
    %v296 = vadd.f32 %v178, %v295
    %v297 = vpop.f32.mrb[0].mxu0
    %v298 = vpop.f32.mrb[0].mxu0
    %299 = vdwg.mxu0
    %v300 = vmax.f32 %v294, 0.0
    %v301 = vmax.f32 %v296, 0.0
    %v302 = vpack.c.bf16 %v300, %v300
    %v303 = vpack.c.bf16 %v301, %v301
    %v304 = vld [vmem:[#allocation8] sm:$0xf]
    %v305 = vld [vmem:[#allocation8 + $0x4] sm:$0xf]
    %v306 = vld [vmem:[#allocation8 + $0x8] sm:$0xf]
    %v307 = vld [vmem:[#allocation8 + $0xc] sm:$0xf]
    %v308 = vld [vmem:[#allocation8 + $0x10] sm:$0xf]
    %v309 = vld [vmem:[#allocation8 + $0x14] sm:$0xf]
    %v310 = vld [vmem:[#allocation8 + $0x18] sm:$0xf]
    %v311 = vld [vmem:[#allocation8 + $0x1c] sm:$0xf]
    %v312 = vld [vmem:[#allocation8 + $0x20] sm:$0xf]
    %v313 = vld [vmem:[#allocation8 + $0x24] sm:$0xf]
    %v314 = vld [vmem:[#allocation8 + $0x28] sm:$0xf]
    %v315 = vld [vmem:[#allocation8 + $0x2c] sm:$0xf]
    %v316 = vld [vmem:[#allocation8 + $0x30] sm:$0xf]
    %v317 = vld [vmem:[#allocation8 + $0x34] sm:$0xf]
    %v318 = vld [vmem:[#allocation8 + $0x38] sm:$0xf]
    %v319 = vld [vmem:[#allocation8 + $0x3c] sm:$0xf]
    %v320 = vld [vmem:[#allocation8 + $0x40] sm:$0xf]
    %v321 = vld [vmem:[#allocation8 + $0x44] sm:$0xf]
    %v322 = vld [vmem:[#allocation8 + $0x48] sm:$0xf]
    %v323 = vld [vmem:[#allocation8 + $0x4c] sm:$0xf]
    %v324 = vld [vmem:[#allocation8 + $0x50] sm:$0xf]
    %v325 = vld [vmem:[#allocation8 + $0x54] sm:$0xf]
    %v326 = vld [vmem:[#allocation8 + $0x58] sm:$0xf]
    %v327 = vld [vmem:[#allocation8 + $0x5c] sm:$0xf]
    %v328 = vld [vmem:[#allocation8 + $0x60] sm:$0xf]
    %v329 = vld [vmem:[#allocation8 + $0x64] sm:$0xf]
    %v330 = vld [vmem:[#allocation8 + $0x68] sm:$0xf]
    %v331 = vld [vmem:[#allocation8 + $0x6c] sm:$0xf]
    %v332 = vld [vmem:[#allocation8 + $0x70] sm:$0xf]
    %v333 = vld [vmem:[#allocation8 + $0x74] sm:$0xf]
    %v334 = vld [vmem:[#allocation8 + $0x78] sm:$0xf]
    %v335 = vld [vmem:[#allocation8 + $0x7c] sm:$0xf]
    %v336 = vlaneseq
    %v337 = vshrl.u32 %v336, 7
    %v338 = vsub.s32 2, %v337
    %v339 = vrot.slane %v75, %v338
    %v372 = vunpack.c.l.b16 %v304
    %v373 = vunpack.c.l.b16 %v305
    %v374 = vunpack.c.l.b16 %v306
    %v375 = vunpack.c.l.b16 %v307
    %v376 = vunpack.c.l.b16 %v308
    %v377 = vunpack.c.l.b16 %v309
    %v378 = vunpack.c.l.b16 %v310
    %v379 = vunpack.c.l.b16 %v311
    %v380 = vunpack.c.l.b16 %v312
    %v381 = vunpack.c.l.b16 %v313
    %v382 = vunpack.c.l.b16 %v314
    %v383 = vunpack.c.l.b16 %v315
    %v384 = vunpack.c.l.b16 %v316
    %v385 = vunpack.c.l.b16 %v317
    %v386 = vunpack.c.l.b16 %v318
    %v387 = vunpack.c.l.b16 %v319
    %v388 = vunpack.c.l.b16 %v320
    %v389 = vunpack.c.l.b16 %v321
    %v390 = vunpack.c.l.b16 %v322
    %v391 = vunpack.c.l.b16 %v323
    %v392 = vunpack.c.l.b16 %v324
    %v393 = vunpack.c.l.b16 %v325
    %v394 = vunpack.c.l.b16 %v326
    %v395 = vunpack.c.l.b16 %v327
    %v396 = vunpack.c.l.b16 %v328
    %v397 = vunpack.c.l.b16 %v329
    %v398 = vunpack.c.l.b16 %v330
    %v399 = vunpack.c.l.b16 %v331
    %v400 = vunpack.c.l.b16 %v332
    %v401 = vunpack.c.l.b16 %v333
    %v402 = vunpack.c.l.b16 %v334
    %v403 = vunpack.c.l.b16 %v335
    %v404 = vpack.c.b16 %v373, %v372
    %v405 = vpack.c.b16 %v375, %v374
    %v406 = vpack.c.b16 %v377, %v376
    %v407 = vpack.c.b16 %v379, %v378
    %v408 = vpack.c.b16 %v381, %v380
    %v409 = vpack.c.b16 %v383, %v382
    %v410 = vpack.c.b16 %v385, %v384
    %v411 = vpack.c.b16 %v387, %v386
    %v412 = vpack.c.b16 %v389, %v388
    %v413 = vpack.c.b16 %v391, %v390
    %v414 = vpack.c.b16 %v393, %v392
    %v415 = vpack.c.b16 %v395, %v394
    %v416 = vpack.c.b16 %v397, %v396
    %v417 = vpack.c.b16 %v399, %v398
    %v418 = vpack.c.b16 %v401, %v400
    %v419 = vpack.c.b16 %v403, %v402
    %436 = vmatprep.subr.bf16.mxu0 0
    %437 = vmatpush1.bf16.msra.mxu0 %v404
    %438 = vmatprep.subr.bf16.mxu0 0
    %439 = vmatpush1.bf16.msra.mxu0 %v405
    %440 = vmatprep.subr.bf16.mxu0 0
    %441 = vmatpush1.bf16.msra.mxu0 %v406
    %442 = vmatprep.subr.bf16.mxu0 0
    %443 = vmatpush1.bf16.msra.mxu0 %v407
    %444 = vmatprep.subr.bf16.mxu0 0
    %445 = vmatpush1.bf16.msra.mxu0 %v408
    %446 = vmatprep.subr.bf16.mxu0 0
    %447 = vmatpush1.bf16.msra.mxu0 %v409
    %448 = vmatprep.subr.bf16.mxu0 0
    %449 = vmatpush1.bf16.msra.mxu0 %v410
    %450 = vmatprep.subr.bf16.mxu0 0
    %451 = vmatpush1.bf16.msra.mxu0 %v411
    %452 = vmatprep.subr.bf16.mxu0 0
    %453 = vmatpush1.bf16.msra.mxu0 %v412
    %454 = vmatprep.subr.bf16.mxu0 0
    %455 = vmatpush1.bf16.msra.mxu0 %v413
    %456 = vmatprep.subr.bf16.mxu0 0
    %457 = vmatpush1.bf16.msra.mxu0 %v414
    %458 = vmatprep.subr.bf16.mxu0 0
    %459 = vmatpush1.bf16.msra.mxu0 %v415
    %460 = vmatprep.subr.bf16.mxu0 0
    %461 = vmatpush1.bf16.msra.mxu0 %v416
    %462 = vmatprep.subr.bf16.mxu0 0
    %463 = vmatpush1.bf16.msra.mxu0 %v417
    %464 = vmatprep.subr.bf16.mxu0 0
    %465 = vmatpush1.bf16.msra.mxu0 %v418
    %466 = vmatprep.subr.bf16.mxu0 0
    %467 = vmatpush1.bf16.msra.mxu0 %v419
    %468 = vmatprep.mubr.bf16.mxu0 %v303
    %469 = vmatmul.mubr.bf16.gmra.mrb[0].mxu0 %v302
    %v470 = vpop.f32.mrb[0].mxu0
    %v471 = vadd.f32 %v339, %v470
    %v472 = vpop.f32.mrb[0].mxu0
    %v473 = vpop.f32.mrb[0].mxu0
    %v474 = vpop.f32.mrb[0].mxu0
    %475 = vdwg.mxu0
    %476 = vst [vmem:[#allocation10] sm:$0xff] %v471
    // Predicated region
    $region38: #{tpu_custom_call.1} parent=1 // pred_check
      _
    $region39: #{tpu_custom_call.1} parent=1 // pred_check_branch
      %478 = sbr.rel (0) target = $region41
    $region40: #{tpu_custom_call.1} parent=1 // pred_region
      %s480 = ssub.s32 128, 128
      %481 = vsyncadd [#allocation4], %s480
      %s483 = sshll.u32 [#allocation10], 4
      %s484 = int_to_ptr.vmem [resolvable:$true] %s483
      %486 = dma.vmem_to_hbm [thread:$0]  %s484, 128, %s5, [#allocation4]
    $region41: #{tpu_custom_call.1} parent=1 // pred_fallthru
      _
    // Predicated region
    $region42: #{tpu_custom_call.1} parent=1 // pred_check
      _
    $region43: #{tpu_custom_call.1} parent=1 // pred_check_branch
      %488 = sbr.rel (0) target = $region45
    $region44: #{tpu_custom_call.1} parent=1 // pred_region
      %489 = dma.done [#allocation4], 128
    $region45: #{tpu_custom_call.1} parent=1 // pred_fallthru
      _
    %490 = vsyncpa [#allocation3], 1
    %491 = vsyncpa [#allocation6], 1
    %492 = vsyncpa [#allocation9], 1
    %493 = vsyncpa [#allocation4], 1

</llo_original>
